<compile_context>
chip_gen: v6e
topology: v6e:2x2x1
jax: 0.10.0
libtpu: 0.0.40
codegen_flags: <defaults>
</compile_context>

<pallas_src>
import functools

import jax
import jax.numpy as jnp
from jax import lax
from jax.experimental import pallas as pl
from jax.experimental.pallas import tpu as pltpu


def _round_up(x: int, m: int) -> int:
    return ((x + m - 1) // m) * m


def _mase_kernel(y_pred_ref, y_true_ref, halo_ref, abs_out_ref, naive_out_ref,
                 *, seasonality: int, s_pad: int, tile_t: int, true_t: int):
    i = pl.program_id(0)
    s = seasonality

    yp = y_pred_ref[...].astype(jnp.float32)
    yt = y_true_ref[...].astype(jnp.float32)

    # Row validity.  Only the (possibly partial) last tile has rows >= true_t;
    # their VMEM contents are unspecified, so they must be masked out.  The
    # mask is built at (tile_t, 1) and broadcast, keeping the iota/compare
    # cost tiny; the selects are hidden under the HBM DMA.
    local_row = lax.broadcasted_iota(jnp.int32, (tile_t, 1), 0)
    global_row = local_row + i * tile_t
    row_ok = global_row < true_t

    # ---- term 1: sum |y_pred - y_true| over valid rows ----------------------
    sum_abs = jnp.sum(jnp.where(row_ok, jnp.abs(yp - yt), 0.0))

    # ---- term 2 (intra-tile): |y_true[j] - y_true[j-s]| for local rows j>=s -
    # rolled[j] = yt[(j - s) mod tile_t]  -> correct predecessor when j >= s.
    rolled = pltpu.roll(yt, shift=s, axis=0)
    main_ok = row_ok & (local_row >= s)
    sum_naive = jnp.sum(jnp.where(main_ok, jnp.abs(yt - rolled), 0.0))

    # ---- term 2 (halo): local rows j < s diff against the previous tile's
    # tail, delivered by the overlapped halo read of rows
    # [i*tile_t - s_pad, i*tile_t).  Align so halo[j] is the predecessor of j.
    halo = halo_ref[...].astype(jnp.float32)
    if s % s_pad:
        halo = pltpu.roll(halo, shift=s % s_pad, axis=0)
    yt_head = yt[:s_pad, :]                       # sublane-aligned static slice
    head_row = lax.broadcasted_iota(jnp.int32, (s_pad, 1), 0)
    head_global = head_row + i * tile_t
    head_ok = (head_row < s) & (head_global >= s) & (head_global < true_t)
    sum_naive = sum_naive + jnp.sum(
        jnp.where(head_ok, jnp.abs(yt_head - halo), 0.0))

    # Per-tile partial sums; combined (and divided) in the wrapper.
    abs_out_ref[...] = jnp.broadcast_to(sum_abs, (1, 8, 128))
    naive_out_ref[...] = jnp.broadcast_to(sum_naive, (1, 8, 128))


def mase_loss(y_pred, y_true, seasonality: int = 1, tile_t=None):
    assert y_pred.shape == y_true.shape and y_pred.ndim == 2
    T, D = y_pred.shape
    s = int(seasonality)
    assert 1 <= s < T, "need more time steps than seasonality"

    itemsize = jnp.dtype(y_pred.dtype).itemsize
    sub = max(8, 32 // max(itemsize, 1))          # dtype-native sublane quantum
    s_pad = _round_up(s, sub)

    # Degenerate tiny-T corner: pad up to one aligned block (cheap, masked).
    if T < s_pad:
        pad = ((0, s_pad - T), (0, 0))
        y_pred = jnp.pad(y_pred, pad)
        y_true = jnp.pad(y_true, pad)
    t_rows = max(T, s_pad)

    # ---- tile sizing from the *actual* VMEM footprint ------------------------
    d_lanes = _round_up(D, 128)                   # VMEM pads the lane dim to 128
    in_row_bytes = d_lanes * itemsize             # one lane-padded input row
    f32_row_bytes = d_lanes * 4
    # 2 inputs x 2 pipeline buffers + ~3 tile-sized f32 temps (casts, roll, diff)
    foot_per_row = 2 * 2 * in_row_bytes + 3 * f32_row_bytes

    try:
        vmem_cap = int(getattr(pltpu.get_tpu_info(), "vmem_capacity_bytes",
                               64 << 20))
    except Exception:                              # pragma: no cover
        vmem_cap = 64 << 20                        # conservative (v7x per-TC)
    vmem_limit = int(min(vmem_cap * 3 // 4, 112 << 20))   # 96 MiB v5e/v6e, 48 MiB v7x
    budget = vmem_limit // 3                       # 2-3x headroom vs. the limit

    if tile_t is None:
        rows_by_budget = budget // foot_per_row
        rows_by_block = (4 << 20) // in_row_bytes  # ~4 MiB per lane-padded block
        tile_t = min(rows_by_budget, rows_by_block)
    tile_t = max(s_pad, (int(tile_t) // s_pad) * s_pad)
    tile_t = min(tile_t, (t_rows // s_pad) * s_pad)   # never exceed the array

    num_tiles = pl.cdiv(t_rows, tile_t)
    bpt = tile_t // s_pad                          # halo blocks per main tile

    kernel = functools.partial(
        _mase_kernel, seasonality=s, s_pad=s_pad, tile_t=tile_t, true_t=T)

    out_abs, out_naive = pl.pallas_call(
        kernel,
        out_shape=(jax.ShapeDtypeStruct((num_tiles, 8, 128), jnp.float32),
                   jax.ShapeDtypeStruct((num_tiles, 8, 128), jnp.float32)),
        grid_spec=pltpu.PrefetchScalarGridSpec(
            num_scalar_prefetch=0,
            grid=(num_tiles,),
            in_specs=[
                pl.BlockSpec((tile_t, D), lambda i: (i, 0)),
                pl.BlockSpec((tile_t, D), lambda i: (i, 0)),
                # Overlapped halo read: previous tile's last s_pad rows of
                # y_true (clamped to block 0 for i == 0, masked in-kernel).
                pl.BlockSpec((s_pad, D),
                             lambda i: (jnp.maximum(i * bpt - 1, 0), 0)),
            ],
            out_specs=[
                pl.BlockSpec((1, 8, 128), lambda i: (i, 0, 0)),
                pl.BlockSpec((1, 8, 128), lambda i: (i, 0, 0)),
            ],
        ),
        compiler_params=pltpu.CompilerParams(
            dimension_semantics=("parallel",),     # no cross-step state: 2-TC OK
            vmem_limit_bytes=vmem_limit),
    )(y_pred, y_true, y_true)

    mae = jnp.sum(out_abs[:, 0, 0]) / float(T * D)
    naive_error = jnp.sum(out_naive[:, 0, 0]) / float((T - s) * D)
    return mae / naive_error


def _ref_mase(y_pred, y_true, s):
    mae = jnp.mean(jnp.abs(y_pred - y_true))
    naive = jnp.mean(jnp.abs(y_true[s:] - y_true[:-s]))
    return mae / naive


if __name__ == "__main__":
    key = jax.random.PRNGKey(0)
    k1, k2, k3, k4 = jax.random.split(key, 4)
    D = 32

    # 1) Multi-tile path (4 tiles of 16 rows) exercises the halo read.
    T = 64
    y_pred = jax.random.normal(k1, (T, D), dtype=jnp.float32)
    y_true = jax.random.normal(k2, (T, D), dtype=jnp.float32)
    got = mase_loss(y_pred, y_true, seasonality=1, tile_t=16)
    jax.block_until_ready(got)
    ref = _ref_mase(y_pred, y_true, 1)
    assert jnp.allclose(got, ref, rtol=1e-4, atol=1e-6), (got, ref)

    # 2) seasonality > 1 + non-divisible T: partial last tile, in-kernel masks.
    T2 = 20
    yp2 = jax.random.normal(k3, (T2, D), dtype=jnp.float32)
    yt2 = jax.random.normal(k4, (T2, D), dtype=jnp.float32)
    got2 = mase_loss(yp2, yt2, seasonality=3, tile_t=8)
    jax.block_until_ready(got2)
    ref2 = _ref_mase(yp2, yt2, 3)
    assert jnp.allclose(got2, ref2, rtol=1e-4, atol=1e-6), (got2, ref2)

    # 3) Default (footprint-based) tile sizing, non-divisible T.
    T3 = 300
    yp3 = jax.random.normal(jax.random.PRNGKey(5), (T3, D), dtype=jnp.float32)
    yt3 = jax.random.normal(jax.random.PRNGKey(6), (T3, D), dtype=jnp.float32)
    got3 = mase_loss(yp3, yt3, seasonality=2)
    jax.block_until_ready(got3)
    ref3 = _ref_mase(yp3, yt3, 2)
    assert jnp.allclose(got3, ref3, rtol=1e-4, atol=1e-6), (got3, ref3)

    print("KERNEL_OK")
</pallas_src>

<mosaic_0001>
module attributes {stable_mosaic.version = 11 : i64} {
  func.func @_mase_kernel(%arg0: i32, %arg1: memref<16x32xf32, #tpu.memory_space<vmem>>, %arg2: memref<16x32xf32, #tpu.memory_space<vmem>>, %arg3: memref<8x32xf32, #tpu.memory_space<vmem>>, %arg4: memref<1x8x128xf32, #tpu.memory_space<vmem>>, %arg5: memref<1x8x128xf32, #tpu.memory_space<vmem>>) attributes {dimension_semantics = [#tpu.dimension_semantics<parallel>], iteration_bounds = array<i64: 4>, scalar_prefetch = 0 : i64, scratch_operands = 0 : i64, tpu.core_type = #tpu.core_type<tc>, window_params = [{transform_indices = @transform_0, window_bounds = array<i64: 16, 32>}, {transform_indices = @transform_1, window_bounds = array<i64: 16, 32>}, {transform_indices = @transform_2, window_bounds = array<i64: 8, 32>}, {transform_indices = @transform_3, window_bounds = array<i64: 1, 8, 128>}, {transform_indices = @transform_4, window_bounds = array<i64: 1, 8, 128>}]} {
    %c0 = arith.constant 0 : index
    %c0_0 = arith.constant 0 : index
    %0 = vector.load %arg1[%c0, %c0_0] : memref<16x32xf32, #tpu.memory_space<vmem>>, vector<16x32xf32>
    %c0_1 = arith.constant 0 : index
    %c0_2 = arith.constant 0 : index
    %1 = vector.load %arg2[%c0_1, %c0_2] : memref<16x32xf32, #tpu.memory_space<vmem>>, vector<16x32xf32>
    %2 = tpu.iota {dimensions = array<i32: 0>} : vector<16x1xi32>
    %c16_i32 = arith.constant 16 : i32
    %3 = arith.muli %arg0, %c16_i32 : i32
    %4 = vector.broadcast %3 : i32 to vector<16x1xi32>
    %5 = arith.addi %2, %4 : vector<16x1xi32>
    %c64_i32 = arith.constant 64 : i32
    %6 = vector.broadcast %c64_i32 : i32 to vector<16x1xi32>
    %7 = arith.cmpi slt, %5, %6 : vector<16x1xi32>
    %8 = arith.subf %0, %1 : vector<16x32xf32>
    %9 = math.absf %8 : vector<16x32xf32>
    %cst = arith.constant 0.000000e+00 : f32
    %10 = vector.shape_cast %7 : vector<16x1xi1> to vector<16x1xi1>
    %11 = vector.broadcast %10 : vector<16x1xi1> to vector<16x32xi1>
    %12 = vector.broadcast %cst : f32 to vector<16x32xf32>
    %13 = arith.select %11, %9, %12 : vector<16x32xi1>, vector<16x32xf32>
    %14 = vector.shape_cast %13 : vector<16x32xf32> to vector<1x16x32xf32>
    %cst_3 = arith.constant dense<0.000000e+00> : vector<1xf32>
    %15 = vector.multi_reduction <add>, %14, %cst_3 [1, 2] : vector<1x16x32xf32> to vector<1xf32>
    %16 = vector.shape_cast %15 : vector<1xf32> to vector<1x1x1xf32>
    %17 = vector.extract %16[0, 0, 0] : f32 from vector<1x1x1xf32>
    %c1_i32 = arith.constant 1 : i32
    %18 = tpu.dynamic_rotate %1 by %c1_i32 dim 0 : vector<16x32xf32>, i32 -> vector<16x32xf32>
    %c1_i32_4 = arith.constant 1 : i32
    %19 = vector.broadcast %c1_i32_4 : i32 to vector<16x1xi32>
    %20 = arith.cmpi sge, %2, %19 : vector<16x1xi32>
    %21 = arith.andi %7, %20 : vector<16x1xi1>
    %22 = arith.subf %1, %18 : vector<16x32xf32>
    %23 = math.absf %22 : vector<16x32xf32>
    %cst_5 = arith.constant 0.000000e+00 : f32
    %24 = vector.shape_cast %21 : vector<16x1xi1> to vector<16x1xi1>
    %25 = vector.broadcast %24 : vector<16x1xi1> to vector<16x32xi1>
    %26 = vector.broadcast %cst_5 : f32 to vector<16x32xf32>
    %27 = arith.select %25, %23, %26 : vector<16x32xi1>, vector<16x32xf32>
    %28 = vector.shape_cast %27 : vector<16x32xf32> to vector<1x16x32xf32>
    %cst_6 = arith.constant dense<0.000000e+00> : vector<1xf32>
    %29 = vector.multi_reduction <add>, %28, %cst_6 [1, 2] : vector<1x16x32xf32> to vector<1xf32>
    %30 = vector.shape_cast %29 : vector<1xf32> to vector<1x1x1xf32>
    %31 = vector.extract %30[0, 0, 0] : f32 from vector<1x1x1xf32>
    %c0_7 = arith.constant 0 : index
    %c0_8 = arith.constant 0 : index
    %32 = vector.load %arg3[%c0_7, %c0_8] : memref<8x32xf32, #tpu.memory_space<vmem>>, vector<8x32xf32>
    %c1_i32_9 = arith.constant 1 : i32
    %33 = tpu.dynamic_rotate %32 by %c1_i32_9 dim 0 : vector<8x32xf32>, i32 -> vector<8x32xf32>
    %34 = vector.extract_strided_slice %1 {offsets = [0, 0], sizes = [8, 32], strides = [1, 1]} : vector<16x32xf32> to vector<8x32xf32>
    %35 = tpu.iota {dimensions = array<i32: 0>} : vector<8x1xi32>
    %c16_i32_10 = arith.constant 16 : i32
    %36 = arith.muli %arg0, %c16_i32_10 : i32
    %37 = vector.broadcast %36 : i32 to vector<8x1xi32>
    %38 = arith.addi %35, %37 : vector<8x1xi32>
    %c1_i32_11 = arith.constant 1 : i32
    %39 = vector.broadcast %c1_i32_11 : i32 to vector<8x1xi32>
    %40 = arith.cmpi slt, %35, %39 : vector<8x1xi32>
    %c1_i32_12 = arith.constant 1 : i32
    %41 = vector.broadcast %c1_i32_12 : i32 to vector<8x1xi32>
    %42 = arith.cmpi sge, %38, %41 : vector<8x1xi32>
    %43 = arith.andi %40, %42 : vector<8x1xi1>
    %c64_i32_13 = arith.constant 64 : i32
    %44 = vector.broadcast %c64_i32_13 : i32 to vector<8x1xi32>
    %45 = arith.cmpi slt, %38, %44 : vector<8x1xi32>
    %46 = arith.andi %43, %45 : vector<8x1xi1>
    %47 = arith.subf %34, %33 : vector<8x32xf32>
    %48 = math.absf %47 : vector<8x32xf32>
    %cst_14 = arith.constant 0.000000e+00 : f32
    %49 = vector.shape_cast %46 : vector<8x1xi1> to vector<8x1xi1>
    %50 = vector.broadcast %49 : vector<8x1xi1> to vector<8x32xi1>
    %51 = vector.broadcast %cst_14 : f32 to vector<8x32xf32>
    %52 = arith.select %50, %48, %51 : vector<8x32xi1>, vector<8x32xf32>
    %53 = vector.shape_cast %52 : vector<8x32xf32> to vector<1x8x32xf32>
    %cst_15 = arith.constant dense<0.000000e+00> : vector<1xf32>
    %54 = vector.multi_reduction <add>, %53, %cst_15 [1, 2] : vector<1x8x32xf32> to vector<1xf32>
    %55 = vector.shape_cast %54 : vector<1xf32> to vector<1x1x1xf32>
    %56 = vector.extract %55[0, 0, 0] : f32 from vector<1x1x1xf32>
    %57 = arith.addf %31, %56 : f32
    %58 = vector.broadcast %17 : f32 to vector<1x8x128xf32>
    %c0_16 = arith.constant 0 : index
    %c0_17 = arith.constant 0 : index
    %c0_18 = arith.constant 0 : index
    %59 = vector.load %arg4[%c0_16, %c0_17, %c0_18] : memref<1x8x128xf32, #tpu.memory_space<vmem>>, vector<1x8x128xf32>
    tpu.vector_store %arg4[%c0_16, %c0_17, %c0_18], %58 {strides = array<i32>} : memref<1x8x128xf32, #tpu.memory_space<vmem>>, vector<1x8x128xf32>,
    %60 = vector.broadcast %57 : f32 to vector<1x8x128xf32>
    %c0_19 = arith.constant 0 : index
    %c0_20 = arith.constant 0 : index
    %c0_21 = arith.constant 0 : index
    %61 = vector.load %arg5[%c0_19, %c0_20, %c0_21] : memref<1x8x128xf32, #tpu.memory_space<vmem>>, vector<1x8x128xf32>
    tpu.vector_store %arg5[%c0_19, %c0_20, %c0_21], %60 {strides = array<i32>} : memref<1x8x128xf32, #tpu.memory_space<vmem>>, vector<1x8x128xf32>,
    return
  }
  func.func @transform_0(%arg0: i32) -> (i32, i32) {
    %c0_i32 = arith.constant 0 : i32
    %c0_i32_0 = arith.constant 0 : i32
    return %arg0, %c0_i32 : i32, i32
  }
  func.func @transform_1(%arg0: i32) -> (i32, i32) {
    %c0_i32 = arith.constant 0 : i32
    %c0_i32_0 = arith.constant 0 : i32
    return %arg0, %c0_i32 : i32, i32
  }
  func.func @transform_2(%arg0: i32) -> (i32, i32) {
    %c2_i32 = arith.constant 2 : i32
    %0 = arith.muli %arg0, %c2_i32 : i32
    %c1_i32 = arith.constant 1 : i32
    %1 = arith.subi %0, %c1_i32 : i32
    %c0_i32 = arith.constant 0 : i32
    %2 = arith.maxsi %1, %c0_i32 : i32
    %c0_i32_0 = arith.constant 0 : i32
    %c0_i32_1 = arith.constant 0 : i32
    return %2, %c0_i32_0 : i32, i32
  }
  func.func @transform_3(%arg0: i32) -> (i32, i32, i32) {
    %c0_i32 = arith.constant 0 : i32
    %c0_i32_0 = arith.constant 0 : i32
    %c0_i32_1 = arith.constant 0 : i32
    return %arg0, %c0_i32, %c0_i32_0 : i32, i32, i32
  }
  func.func @transform_4(%arg0: i32) -> (i32, i32, i32) {
    %c0_i32 = arith.constant 0 : i32
    %c0_i32_0 = arith.constant 0 : i32
    %c0_i32_1 = arith.constant 0 : i32
    return %arg0, %c0_i32, %c0_i32_0 : i32, i32, i32
  }
}

</mosaic_0001>

<llo_original>
// kernel: tpu_custom_call.1
$region0: #{tpu_custom_call.1}
  #allocation0 [shape = 'u32[]', space=smem, size = 0x4, offset = 0x4, fixed_abs, tag = 'smem constant byte address 0x4 - core index']
  #allocation1 [shape = 'u32[144,128]{1,0:T(1,128)}', space=vmem, size = 0x12000, scoped, tag = 'internal scratch']
  %s0 = inlined_call_operand.vmem [shape: f32[64,32], index: 0, kind: input, shape index: {}]
  %s1 = inlined_call_operand.vmem [shape: f32[64,32], index: 1, kind: input, shape index: {}]
  %s2 = inlined_call_operand.vmem [shape: f32[64,32], index: 2, kind: input, shape index: {}]
  %s3 = inlined_call_operand.hbm [shape: f32[4,8,128], index: 3, kind: output, shape index: {0}]
  %s4 = inlined_call_operand.hbm [shape: f32[4,8,128], index: 4, kind: output, shape index: {1}]
  %5 = xla_tuple %s3, %s4
  %s6 = sld [smem:[#allocation0]]
  $region53: #{tpu_custom_call.1} parent=0
    _
  %s8 = ssub.s32 1, %s6
  %s9 = scalar_select 0, %s8, %s6
  $region1: #{tpu_custom_call.1} parent=0
    #allocation2 [shape = 'u8[8192]{0}', space=vmem, size = 0x2000, scoped, tag = 'output window, operand 0']
    #allocation3 [shape = 's32[2]{0}', space=sflag, size = 0x8, scoped, tag = 'scoped memory for tpu_custom_call.1']
    #allocation4 [shape = 'u8[8192]{0}', space=vmem, size = 0x2000, scoped, tag = 'output window, operand 1']
    #allocation5 [shape = 's32[2]{0}', space=sflag, size = 0x8, scoped, tag = 'scoped memory for tpu_custom_call.1']
    %10 = vsyncpa [#allocation3], 0
    %s11 = scalar_lea.sflag [#allocation3], 1
    %12 = vsyncpa %s11, 0
    %13 = vsyncpa [#allocation5], 0
    %s14 = scalar_lea.sflag [#allocation5], 1
    %15 = vsyncpa %s14, 0
    loop: start=0, step=1, limit=6
    $region2: #{tpu_custom_call.1} parent=1 // loop_pre_header
      _
    $region3: #{tpu_custom_call.1} parent=1 // loop_header
      %s17 = sphi 0, %s21
      %p18 = scmp.ge.s32.totalorder %s17, 6
      %s27 = sphi 0, %s29
      %s30 = sphi 0, %s27
      %s31 = sphi 0, %s30
      %s47 = sphi 0, %s31
      %s53 = sphi 0, %s55
      %s56 = sphi 0, %s53
      %s57 = sphi 0, %s56
      %s73 = sphi 0, %s57
      %s87 = sphi 0, %s89
      %s90 = sphi 0, %s87
      %s91 = sphi 0, %s90
      %s107 = sphi 0, %s91
      %s113 = sphi 0, %s115
      %s116 = sphi 0, %s113
      %s117 = sphi 0, %s116
      %s133 = sphi 0, %s117
      %s139 = sphi 0, %s141
      %s142 = sphi 0, %s139
      %s143 = sphi 0, %s142
      %s159 = sphi 0, %s143
    $region4: #{tpu_custom_call.1} parent=1 // loop_header_branch
      %20 = sbr.rel (%p18) target = $region8
    $region5: #{tpu_custom_call.1} parent=1 // loop_body
      %s22 = ssub.s32 %s17, 1
      %s23 = ssub.s32 %s17, 2
      %s24 = sadd.s32 %s17, 1
      %s25 = ssub.s32 %s17, %s24
      %p26 = scmp.eq.s32.totalorder %s25, 0
      %s28 = sadd.s32 %s27, 1
      %s29 = scalar_select %p26, %s27, %s28
      %p32 = pneg %p26
      %p33 = scmp.eq.s32.totalorder %s17, 3
      %p34 = por %p32, %p33
      %p35 = scmp.ne.s32.totalorder %s27, %s30
      %p36 = scmp.eq.s32.totalorder %s17, 0
      %p37 = por %p35, %p36
      %p38 = scmp.ne.s32.totalorder %s27, %s30
      %p39 = scmp.eq.s32.totalorder %s22, 3
      %p40 = por %p38, %p39
      %p41 = scmp.ne.s32.totalorder %s30, %s31
      %p42 = scmp.eq.s32.totalorder %s22, 0
      %p43 = por %p41, %p42
      %p44 = scmp.ne.s32.totalorder %s30, %s31
      %p45 = scmp.eq.s32.totalorder %s23, 3
      %p46 = por %p44, %p45
      %p48 = scmp.ne.s32.totalorder %s31, %s47
      %p49 = scmp.eq.s32.totalorder %s23, 0
      %p50 = por %p48, %p49
      %s51 = ssub.s32 %s17, %s24
      %p52 = scmp.eq.s32.totalorder %s51, 0
      %s54 = sadd.s32 %s53, 1
      %s55 = scalar_select %p52, %s53, %s54
      %p58 = pneg %p52
      %p59 = scmp.eq.s32.totalorder %s17, 3
      %p60 = por %p58, %p59
      %p61 = scmp.ne.s32.totalorder %s53, %s56
      %p62 = scmp.eq.s32.totalorder %s17, 0
      %p63 = por %p61, %p62
      %p64 = scmp.ne.s32.totalorder %s53, %s56
      %p65 = scmp.eq.s32.totalorder %s22, 3
      %p66 = por %p64, %p65
      %p67 = scmp.ne.s32.totalorder %s56, %s57
      %p68 = scmp.eq.s32.totalorder %s22, 0
      %p69 = por %p67, %p68
      %p70 = scmp.ne.s32.totalorder %s56, %s57
      %p71 = scmp.eq.s32.totalorder %s23, 3
      %p72 = por %p70, %p71
      %p74 = scmp.ne.s32.totalorder %s57, %s73
      %p75 = scmp.eq.s32.totalorder %s23, 0
      %p76 = por %p74, %p75
      %s77 = smul.u32 %s17, 2
      %s78 = ssub.s32 %s77, 1
      %p79 = scmp.gt.s32.totalorder %s78, 0
      %s80 = scalar_select %p79, %s78, 0
      %s81 = smul.u32 %s24, 2
      %s82 = ssub.s32 %s81, 1
      %p83 = scmp.gt.s32.totalorder %s82, 0
      %s84 = scalar_select %p83, %s82, 0
      %s85 = ssub.s32 %s80, %s84
      %p86 = scmp.eq.s32.totalorder %s85, 0
      %s88 = sadd.s32 %s87, 1
      %s89 = scalar_select %p86, %s87, %s88
      %p92 = pneg %p86
      %p93 = scmp.eq.s32.totalorder %s17, 3
      %p94 = por %p92, %p93
      %p95 = scmp.ne.s32.totalorder %s87, %s90
      %p96 = scmp.eq.s32.totalorder %s17, 0
      %p97 = por %p95, %p96
      %p98 = scmp.ne.s32.totalorder %s87, %s90
      %p99 = scmp.eq.s32.totalorder %s22, 3
      %p100 = por %p98, %p99
      %p101 = scmp.ne.s32.totalorder %s90, %s91
      %p102 = scmp.eq.s32.totalorder %s22, 0
      %p103 = por %p101, %p102
      %p104 = scmp.ne.s32.totalorder %s90, %s91
      %p105 = scmp.eq.s32.totalorder %s23, 3
      %p106 = por %p104, %p105
      %p108 = scmp.ne.s32.totalorder %s91, %s107
      %p109 = scmp.eq.s32.totalorder %s23, 0
      %p110 = por %p108, %p109
      %s111 = ssub.s32 %s17, %s24
      %p112 = scmp.eq.s32.totalorder %s111, 0
      %s114 = sadd.s32 %s113, 1
      %s115 = scalar_select %p112, %s113, %s114
      %p118 = pneg %p112
      %p119 = scmp.eq.s32.totalorder %s17, 3
      %p120 = por %p118, %p119
      %p121 = scmp.ne.s32.totalorder %s113, %s116
      %p122 = scmp.eq.s32.totalorder %s17, 0
      %p123 = por %p121, %p122
      %p124 = scmp.ne.s32.totalorder %s113, %s116
      %p125 = scmp.eq.s32.totalorder %s22, 3
      %p126 = por %p124, %p125
      %p127 = scmp.ne.s32.totalorder %s116, %s117
      %p128 = scmp.eq.s32.totalorder %s22, 0
      %p129 = por %p127, %p128
      %p130 = scmp.ne.s32.totalorder %s116, %s117
      %p131 = scmp.eq.s32.totalorder %s23, 3
      %p132 = por %p130, %p131
      %p134 = scmp.ne.s32.totalorder %s117, %s133
      %p135 = scmp.eq.s32.totalorder %s23, 0
      %p136 = por %p134, %p135
      %s137 = ssub.s32 %s17, %s24
      %p138 = scmp.eq.s32.totalorder %s137, 0
      %s140 = sadd.s32 %s139, 1
      %s141 = scalar_select %p138, %s139, %s140
      %p144 = pneg %p138
      %p145 = scmp.eq.s32.totalorder %s17, 3
      %p146 = por %p144, %p145
      %p147 = scmp.ne.s32.totalorder %s139, %s142
      %p148 = scmp.eq.s32.totalorder %s17, 0
      %p149 = por %p147, %p148
      %p150 = scmp.ne.s32.totalorder %s139, %s142
      %p151 = scmp.eq.s32.totalorder %s22, 3
      %p152 = por %p150, %p151
      %p153 = scmp.ne.s32.totalorder %s142, %s143
      %p154 = scmp.eq.s32.totalorder %s22, 0
      %p155 = por %p153, %p154
      %p156 = scmp.ne.s32.totalorder %s142, %s143
      %p157 = scmp.eq.s32.totalorder %s23, 3
      %p158 = por %p156, %p157
      %p160 = scmp.ne.s32.totalorder %s143, %s159
      %p161 = scmp.eq.s32.totalorder %s23, 0
      %p162 = por %p160, %p161
      %p163 = scmp.le.s32.totalorder 1, %s17
      %p164 = scmp.lt.s32.totalorder %s17, 5
      %p165 = pnand %p163, %p164
      %p166 = pneg %p165
      // Predicated region
      $region9: #{tpu_custom_call.1} parent=5 // pred_check
        _
      $region10: #{tpu_custom_call.1} parent=5 // pred_check_branch
        %168 = sbr.rel (%p165) target = $region12
      $region11: #{tpu_custom_call.1} parent=5 // pred_region
        %s169 = ssub.s32 %s17, 1
      $region12: #{tpu_custom_call.1} parent=5 // pred_fallthru
        _
      %p170 = scmp.lt.s32.totalorder %s17, 4
      // Predicated region
      $region13: #{tpu_custom_call.1} parent=5 // pred_check
        %p171 = pneg %p170
      $region14: #{tpu_custom_call.1} parent=5 // pred_check_branch
        %173 = sbr.rel (%p171) target = $region16
      $region15: #{tpu_custom_call.1} parent=5 // pred_region
        // Predicated region
        $region17: #{tpu_custom_call.1} parent=15 // pred_check
          %p174 = pneg %p37
        $region18: #{tpu_custom_call.1} parent=15 // pred_check_branch
          %176 = sbr.rel (%p174) target = $region20
        $region19: #{tpu_custom_call.1} parent=15 // pred_region
          %s177 = smul.u32 2, %s17
          %p178 = scmp.lt.s32.totalorder %s177, 7
          %s179 = scalar_select %p178, %s177, 7
          %s180 = smul.addr %s179, 8
          %s181 = scalar_lea.vmem %s0, %s180
          %s182 = smul.u32 2, %s17
        $region20: #{tpu_custom_call.1} parent=15 // pred_fallthru
          _
        // Predicated region
        $region21: #{tpu_custom_call.1} parent=15 // pred_check
          %p183 = pneg %p63
        $region22: #{tpu_custom_call.1} parent=15 // pred_check_branch
          %185 = sbr.rel (%p183) target = $region24
        $region23: #{tpu_custom_call.1} parent=15 // pred_region
          %s186 = smul.u32 2, %s17
          %p187 = scmp.lt.s32.totalorder %s186, 7
          %s188 = scalar_select %p187, %s186, 7
          %s189 = smul.addr %s188, 8
          %s190 = scalar_lea.vmem %s1, %s189
          %s191 = smul.u32 2, %s17
        $region24: #{tpu_custom_call.1} parent=15 // pred_fallthru
          _
        // Predicated region
        $region25: #{tpu_custom_call.1} parent=15 // pred_check
          %p192 = pneg %p97
        $region26: #{tpu_custom_call.1} parent=15 // pred_check_branch
          %194 = sbr.rel (%p192) target = $region28
        $region27: #{tpu_custom_call.1} parent=15 // pred_region
          %s195 = smul.u32 %s17, 2
          %s196 = ssub.s32 %s195, 1
          %p197 = scmp.gt.s32.totalorder %s196, 0
          %s198 = scalar_select %p197, %s196, 0
          %p199 = scmp.lt.s32.totalorder %s198, 7
          %s200 = scalar_select %p199, %s198, 7
          %s201 = smul.addr %s200, 8
          %s202 = scalar_lea.vmem %s2, %s201
          %s203 = smul.u32 %s17, 2
          %s204 = ssub.s32 %s203, 1
          %p205 = scmp.gt.s32.totalorder %s204, 0
          %s206 = scalar_select %p205, %s204, 0
        $region28: #{tpu_custom_call.1} parent=15 // pred_fallthru
          _
      $region16: #{tpu_custom_call.1} parent=5 // pred_fallthru
        _
      %p207 = scmp.le.s32.totalorder 1, %s17
      %p208 = scmp.lt.s32.totalorder %s17, 5
      %p209 = pnand %p207, %p208
      %p210 = pneg %p209
      // Predicated region
      $region29: #{tpu_custom_call.1} parent=5 // pred_check
        _
      $region30: #{tpu_custom_call.1} parent=5 // pred_check_branch
        %212 = sbr.rel (%p209) target = $region32
      $region31: #{tpu_custom_call.1} parent=5 // pred_region
        %s213 = ssub.s32 %s17, 1
        %s214 = smul.u32 2, %s22
        %p215 = scmp.lt.s32.totalorder %s214, 7
        %s216 = scalar_select %p215, %s214, 7
        %s217 = smul.addr %s216, 8
        %s218 = scalar_lea.vmem %s0, %s217
        %p219 = pneg %p43
        %p220 = pneg %p40
        %s221 = smul.u32 2, %s22
        %p222 = scmp.lt.s32.totalorder %s221, 7
        %s223 = scalar_select %p222, %s221, 7
        %s224 = smul.addr %s223, 8
        %s225 = scalar_lea.vmem %s1, %s224
        %p226 = pneg %p69
        %p227 = pneg %p66
        %s228 = smul.u32 %s22, 2
        %s229 = ssub.s32 %s228, 1
        %p230 = scmp.gt.s32.totalorder %s229, 0
        %s231 = scalar_select %p230, %s229, 0
        %p232 = scmp.lt.s32.totalorder %s231, 7
        %s233 = scalar_select %p232, %s231, 7
        %s234 = smul.addr %s233, 8
        %s235 = scalar_lea.vmem %s2, %s234
        %p236 = pneg %p103
        %p237 = pneg %p100
        %p238 = pneg %p129
        %p239 = pneg %p126
        %s240 = sand.u32 %s116, 1
        %s241 = scalar_lea.sflag [#allocation3], %s240
        %s242 = sand.u32 %s116, 1
        %s243 = smul.addr %s242, 8
        %s244 = scalar_lea.vmem [#allocation2], %s243
        %p245 = pneg %p155
        %p246 = pneg %p152
        %s247 = sand.u32 %s142, 1
        %s248 = scalar_lea.sflag [#allocation5], %s247
        %s249 = sand.u32 %s142, 1
        %s250 = smul.addr %s249, 8
        %s251 = scalar_lea.vmem [#allocation4], %s250
        %s252 = smul.u32 2, %s22
        %p253 = scmp.lt.s32.totalorder %s252, 7
        %s254 = scalar_select %p253, %s252, 7
        %s255 = smul.addr %s254, 8
        %s256 = scalar_lea.vmem %s0, %s255
        %s257 = smul.u32 2, %s22
        %s258 = smul.u32 2, %s22
        %p259 = scmp.lt.s32.totalorder %s258, 7
        %s260 = scalar_select %p259, %s258, 7
        %s261 = smul.addr %s260, 8
        %s262 = scalar_lea.vmem %s1, %s261
        %s263 = smul.u32 2, %s22
        %s264 = smul.u32 %s22, 2
        %s265 = ssub.s32 %s264, 1
        %p266 = scmp.gt.s32.totalorder %s265, 0
        %s267 = scalar_select %p266, %s265, 0
        %p268 = scmp.lt.s32.totalorder %s267, 7
        %s269 = scalar_select %p268, %s267, 7
        %s270 = smul.addr %s269, 8
        %s271 = scalar_lea.vmem %s2, %s270
        %s272 = smul.u32 %s22, 2
        %s273 = ssub.s32 %s272, 1
        %p274 = scmp.gt.s32.totalorder %s273, 0
        %s275 = scalar_select %p274, %s273, 0
        %v276 = vld [vmem:[%s256] sm:$0xff]
        %v277 = vld [vmem:[%s256 + $0x8] sm:$0xff]
        %v278 = vld [vmem:[%s262] sm:$0xff]
        %v279 = vld [vmem:[%s262 + $0x8] sm:$0xff]
        %v280 = vlaneseq
        %v281 = vshrl.u32 %v280, 7
        %v282 = vadd.s32 %v281, 8
        %s283 = smul.u32 %s22, 16
        %v284 = vstv %s283
        %v285 = vadd.s32 %v281, %v284
        %v286 = vadd.s32 %v282, %v284
        %vm287 = vcmp.lt.s32.totalorder %v285, 64
        %vm288 = vcmp.lt.s32.totalorder %v286, 64
        %v289 = vsub.f32 %v276, %v278
        %v290 = vsub.f32 %v277, %v279
        %v291 = vand.u32 2147483647, %v289
        %v292 = vand.u32 2147483647, %v290
        %v293 = vsel %vm287, 1, 0
        %v294 = vsel %vm288, 1, 0
        %vm295 = vcmp.eq.s32.totalorder %v293, 1
        %vm296 = vcmp.eq.s32.totalorder %v294, 1
        %v297 = vsel %vm295, %v291, 0.0
        %v298 = vsel %vm296, %v292, 0.0
        %vm299 = vcmask 261120
        %v300 = vsel %vm299, %v297, 0.0
        %v301 = vsel %vm299, %v298, 0.0
        %v302 = vadd.f32 %v300, %v301
        %303 = vadd.xlane.f32.xlu0 %v302
        %v304 = vpop.xlane.xlu0 %303
        %v305 = vrot.slane %v304, 4
        %v306 = vadd.f32 %v304, %v305
        %v307 = vrot.slane %v306, 2
        %v308 = vadd.f32 %v306, %v307
        %v309 = vrot.slane %v308, 1
        %v310 = vadd.f32 %v308, %v309
        %s311 = vtos %v310
        %v312 = vrot.slane %v278, 7
        %v313 = vrot.slane %v279, 7
        %vm314 = vcmp.lt.s32.totalorder %v281, 1
        %v315 = vsel %vm314, %v312, %v313
        %v316 = vsel %vm314, %v313, %v312
        %vm317 = vcmp.ge.s32.totalorder %v281, 1
        %vm318 = vcmp.ge.s32.totalorder %v282, 1
        %vm319 = vmand %vm287, %vm317
        %vm320 = vmand %vm288, %vm318
        %v321 = vsub.f32 %v278, %v316
        %v322 = vsub.f32 %v279, %v315
        %v323 = vand.u32 2147483647, %v321
        %v324 = vand.u32 2147483647, %v322
        %v325 = vsel %vm319, 1, 0
        %v326 = vsel %vm320, 1, 0
        %vm327 = vcmp.eq.s32.totalorder %v325, 1
        %vm328 = vcmp.eq.s32.totalorder %v326, 1
        %v329 = vsel %vm327, %v323, 0.0
        %v330 = vsel %vm328, %v324, 0.0
        %v331 = vsel %vm299, %v329, 0.0
        %v332 = vsel %vm299, %v330, 0.0
        %v333 = vadd.f32 %v331, %v332
        %334 = vadd.xlane.f32.xlu0 %v333
        %v335 = vpop.xlane.xlu0 %334
        %v336 = vrot.slane %v335, 4
        %v337 = vadd.f32 %v335, %v336
        %v338 = vrot.slane %v337, 2
        %v339 = vadd.f32 %v337, %v338
        %v340 = vrot.slane %v339, 1
        %v341 = vadd.f32 %v339, %v340
        %s342 = vtos %v341
        %v343 = vld [vmem:[%s271] sm:$0xff]
        %v344 = vrot.slane %v343, 7
        %vm345 = vcmp.ge.s32.totalorder %v285, 1
        %vm346 = vmand %vm314, %vm345
        %vm347 = vmand %vm346, %vm287
        %v348 = vsub.f32 %v278, %v344
        %v349 = vand.u32 2147483647, %v348
        %v350 = vsel %vm347, 1, 0
        %vm351 = vcmp.eq.s32.totalorder %v350, 1
        %v352 = vsel %vm351, %v349, 0.0
        %v353 = vsel %vm299, %v352, 0.0
        %354 = vadd.xlane.f32.xlu0 %v353
        %v355 = vpop.xlane.xlu0 %354
        %v356 = vrot.slane %v355, 4
        %v357 = vadd.f32 %v355, %v356
        %v358 = vrot.slane %v357, 2
        %v359 = vadd.f32 %v357, %v358
        %v360 = vrot.slane %v359, 1
        %v361 = vadd.f32 %v359, %v360
        %s362 = vtos %v361
        %s363 = sadd.f32 %s342, %s362
        %v364 = vstv %s311
        %365 = vst [vmem:[%s244] sm:$0xff] %v364
        %v366 = vstv %s363
        %367 = vst [vmem:[%s251] sm:$0xff] %v366
        %s368 = sand.u32 %s116, 1
        %s369 = scalar_lea.sflag [#allocation3], %s368
        %s370 = sand.u32 %s116, 1
        %s371 = smul.addr %s370, 8
        %s372 = scalar_lea.vmem [#allocation2], %s371
        %s373 = sand.u32 %s142, 1
        %s374 = scalar_lea.sflag [#allocation5], %s373
        %s375 = sand.u32 %s142, 1
        %s376 = smul.addr %s375, 8
        %s377 = scalar_lea.vmem [#allocation4], %s376
        // Predicated region
        $region33: #{tpu_custom_call.1} parent=31 // pred_check
          %p378 = pneg %p126
        $region34: #{tpu_custom_call.1} parent=31 // pred_check_branch
          %380 = sbr.rel (%p378) target = $region36
        $region35: #{tpu_custom_call.1} parent=31 // pred_region
          %s382 = ssub.s32 128, 128
          %383 = vsyncadd %s369, %s382
          %s384 = smul.addr %s22, 128
          %s385 = scalar_lea.hbm %s3, %s384
          %s387 = sshll.u32 %s372, 4
          %s388 = int_to_ptr.vmem [resolvable:$true] %s387
          %390 = dma.vmem_to_hbm [thread:$0]  %s388, 128, %s385, %s369
        $region36: #{tpu_custom_call.1} parent=31 // pred_fallthru
          _
        // Predicated region
        $region37: #{tpu_custom_call.1} parent=31 // pred_check
          %p391 = pneg %p152
        $region38: #{tpu_custom_call.1} parent=31 // pred_check_branch
          %393 = sbr.rel (%p391) target = $region40
        $region39: #{tpu_custom_call.1} parent=31 // pred_region
          %s395 = ssub.s32 128, 128
          %396 = vsyncadd %s374, %s395
          %s397 = smul.addr %s22, 128
          %s398 = scalar_lea.hbm %s4, %s397
          %s400 = sshll.u32 %s377, 4
          %s401 = int_to_ptr.vmem [resolvable:$true] %s400
          %403 = dma.vmem_to_hbm [thread:$0]  %s401, 128, %s398, %s374
        $region40: #{tpu_custom_call.1} parent=31 // pred_fallthru
          _
      $region32: #{tpu_custom_call.1} parent=5 // pred_fallthru
        _
      %p404 = scmp.le.s32.totalorder 2, %s17
      // Predicated region
      $region41: #{tpu_custom_call.1} parent=5 // pred_check
        %p405 = pneg %p404
      $region42: #{tpu_custom_call.1} parent=5 // pred_check_branch
        %407 = sbr.rel (%p405) target = $region44
      $region43: #{tpu_custom_call.1} parent=5 // pred_region
        %s408 = ssub.s32 %s17, 2
        // Predicated region
        $region45: #{tpu_custom_call.1} parent=43 // pred_check
          %p409 = pneg %p132
        $region46: #{tpu_custom_call.1} parent=43 // pred_check_branch
          %411 = sbr.rel (%p409) target = $region48
        $region47: #{tpu_custom_call.1} parent=43 // pred_region
          %s412 = sand.u32 %s117, 1
          %s413 = scalar_lea.sflag [#allocation3], %s412
          %s414 = sand.u32 %s117, 1
          %s415 = smul.addr %s414, 8
          %s416 = scalar_lea.vmem [#allocation2], %s415
          %417 = dma.done %s413, 128
        $region48: #{tpu_custom_call.1} parent=43 // pred_fallthru
          _
        // Predicated region
        $region49: #{tpu_custom_call.1} parent=43 // pred_check
          %p418 = pneg %p158
        $region50: #{tpu_custom_call.1} parent=43 // pred_check_branch
          %420 = sbr.rel (%p418) target = $region52
        $region51: #{tpu_custom_call.1} parent=43 // pred_region
          %s421 = sand.u32 %s143, 1
          %s422 = scalar_lea.sflag [#allocation5], %s421
          %s423 = sand.u32 %s143, 1
          %s424 = smul.addr %s423, 8
          %s425 = scalar_lea.vmem [#allocation4], %s424
          %426 = dma.done %s422, 128
        $region52: #{tpu_custom_call.1} parent=43 // pred_fallthru
          _
      $region44: #{tpu_custom_call.1} parent=5 // pred_fallthru
        _
    $region6: #{tpu_custom_call.1} parent=1 // loop_footer
      %s21 = sadd.s32 1, %s17
    $region7: #{tpu_custom_call.1} parent=1 // loop_footer_branch
      %16 = sbr.rel target = $region3
    $region8: #{tpu_custom_call.1} parent=1 // loop_exit
      _
    %427 = vsyncpa [#allocation3], 1
    %s428 = scalar_lea.sflag [#allocation3], 1
    %429 = vsyncpa %s428, 1
    %430 = vsyncpa [#allocation5], 1
    %s431 = scalar_lea.sflag [#allocation5], 1
    %432 = vsyncpa %s431, 1

</llo_original>
